<compile_context>
chip_gen: v6e
topology: v6e:2x2x1
jax: 0.10.0
libtpu: 0.0.40
codegen_flags: <defaults>
</compile_context>

<pallas_src>
import functools

import jax
import jax.numpy as jnp
from jax.experimental import pallas as pl
from jax.experimental.pallas import tpu as pltpu


def _token_regression_kernel(*refs, special_ids, mask_provided):
    if mask_provided:
        ids_ref, mask_ref, x_ref, w_ref, b_ref, out_ref = refs
    else:
        ids_ref, x_ref, w_ref, b_ref, out_ref = refs
        mask_ref = None

    # ids_ref / mask_ref / out_ref : (1, TM)  lane-dense token rows
    # x_ref                        : (TM, H)  backbone activations (native dtype)
    # w_ref                        : (1, H)   regression weight row (resident,
    #                                         pre-cast to the activation dtype)
    # b_ref                        : (1, 1)   SMEM f32 regression bias

    # Linear(H -> 1): native-dtype VPU multiply (bf16 VALU on v6e/v7x; f32
    # stays f32) + XLU lane reduce with f32 accumulation.  No whole-tile f32
    # upcast; the MXU would use 1/128 of its columns for an H->1 projection.
    row = jnp.sum(x_ref[...] * w_ref[...], axis=-1, dtype=jnp.float32)   # (TM,)
    logits = row[None, :] + b_ref[0, 0]                                  # (1, TM)

    # Fused masking: attention mask * every special-id mask in one multiply.
    ids = ids_ref[...]                                                   # (1, TM)
    keep = jnp.ones(ids.shape, dtype=jnp.bool_)
    for sid in special_ids:
        keep = jnp.logical_and(keep, ids != sid)
    mask = keep.astype(jnp.float32)
    if mask_provided:
        mask = mask * mask_ref[...].astype(jnp.float32)

    # Out-of-bounds columns of the last (ragged) tile are masked off by the
    # Pallas writeback, so no explicit tail mask is needed here.
    out_ref[...] = logits * mask


def _tile_and_vmem(M, H, itemsize, tokens_per_tile):
    """Generation-aware token-tile size, grid length and VMEM limit."""
    try:
        vmem_cap = int(pltpu.get_tpu_info().vmem_capacity_bytes)
    except Exception:
        vmem_cap = 64 << 20                      # conservative: v7x per-TC VMEM

    headroom = 16 << 20                          # Mosaic scratch + small tiles
    budget = max(8 << 20, vmem_cap - headroom)

    # Per-token VMEM footprint: double-buffered activation tile plus (worst
    # case, f32 inputs) a streamed (TM, H) f32 product temp for the reduce,
    # plus double-buffered ids/mask/out rows.
    per_token = 2 * H * itemsize + 4 * H + 64
    tm_cap = max(128, budget // per_token)

    if tokens_per_tile is None:
        # Per-grid-step overhead is ~0.35 us; 8-16 MiB activation blocks keep
        # it to a few % of the per-tile DMA time on every generation.
        target_bytes = (16 << 20) if vmem_cap >= (96 << 20) else (8 << 20)
        tokens_per_tile = target_bytes // max(1, H * itemsize)

    if M < 128:
        tm = M                                   # single full-extent block
    else:
        tm = min(int(tokens_per_tile), int(tm_cap), M)
        tm = max(128, (tm // 128) * 128)
        if M >= 256:
            # Ensure >= 2 grid steps so v7x's 2 TensorCores both get work
            # (free elsewhere: just one more pipelined step).
            half = ((((M + 1) // 2) + 127) // 128) * 128
            tm = min(tm, half)
        g = (M + tm - 1) // tm
        # Balance tiles across the g steps (never increases tm).
        tm = max(128, ((((M + g - 1) // g) + 127) // 128) * 128)

    g = (M + tm - 1) // tm
    est = (2 * tm * H * itemsize                 # double-buffered x tiles
           + tm * H * 4                          # f32 reduce temp (worst case)
           + 8 * tm * 4                          # ids / mask / out rows (x2 buf)
           + 2 * H * 4 + (1 << 20))              # weight row + slack
    vmem_limit = int(min(max(est + (4 << 20), 32 << 20), max(budget, 32 << 20)))
    return int(tm), int(g), vmem_limit


def token_regression_forward(input_ids, sequence_output, reg_weight, reg_bias,
                             special_ids, attention_mask=None,
                             tokens_per_tile=None):
    """Pallas equivalent of ModelForTokenRegression.forward given the backbone
    output `sequence_output` (= outputs.last_hidden_state)."""
    B, S = input_ids.shape
    H = sequence_output.shape[-1]
    M = B * S
    x_dtype = sequence_output.dtype
    itemsize = jnp.dtype(x_dtype).itemsize
    mask_provided = attention_mask is not None

    TM, G, vmem_limit = _tile_and_vmem(M, H, itemsize, tokens_per_tile)

    # ---- free layout plumbing only: no copies of the (M, H) activations ----
    x = sequence_output.reshape(M, H)
    ids = input_ids.reshape(1, M)                               # native int dtype
    w = jnp.asarray(reg_weight).reshape(1, H).astype(x_dtype)   # resident row
    b = jnp.asarray(reg_bias, jnp.float32).reshape(1, 1)        # SMEM scalar

    token_row_spec = pl.BlockSpec((1, TM), lambda i: (0, i))

    inputs = [ids]
    in_specs = [token_row_spec]                                 # ids
    if mask_provided:
        inputs.append(attention_mask.reshape(1, M))             # native dtype
        in_specs.append(token_row_spec)                         # mask
    inputs += [x, w, b]
    in_specs += [
        pl.BlockSpec((TM, H), lambda i: (i, 0)),                # streamed x tiles
        pl.BlockSpec((1, H), lambda i: (0, 0)),                 # resident weight
        pl.BlockSpec(memory_space=pltpu.MemorySpace.SMEM),      # bias scalar
    ]

    kernel = functools.partial(
        _token_regression_kernel,
        special_ids=tuple(int(s) for s in special_ids),
        mask_provided=mask_provided,
    )

    out = pl.pallas_call(
        kernel,
        out_shape=jax.ShapeDtypeStruct((1, M), jnp.float32),
        grid=(G,),
        in_specs=in_specs,
        out_specs=token_row_spec,
        compiler_params=pltpu.CompilerParams(
            dimension_semantics=("parallel",),
            vmem_limit_bytes=vmem_limit,
        ),
    )(*inputs)

    return out.reshape(B, S, 1)


def _reference(input_ids, sequence_output, reg_weight, reg_bias, special_ids,
               attention_mask=None):
    if attention_mask is None:
        attention_mask = jnp.ones_like(input_ids)
        for sid in special_ids:
            attention_mask = attention_mask * (input_ids != sid)
    w = jnp.asarray(reg_weight, jnp.float32).reshape(-1)
    b = jnp.asarray(reg_bias, jnp.float32).reshape(())
    logits = jnp.einsum("bsh,h->bs", sequence_output.astype(jnp.float32), w) + b
    logits = logits[..., None]
    logits = logits * attention_mask[..., None].astype(jnp.float32)
    for sid in special_ids:
        logits = logits * (input_ids != sid)[..., None].astype(jnp.float32)
    return logits


if __name__ == "__main__":
    B, S, H = 2, 8, 32
    special_ids = (0, 1, 2)  # e.g. pad / bos / eos token ids

    key = jax.random.PRNGKey(0)
    k_ids, k_seq, k_w, k_b, k_m = jax.random.split(key, 5)

    input_ids = jax.random.randint(k_ids, (B, S), 0, 50, dtype=jnp.int32)
    sequence_output = jax.random.normal(k_seq, (B, S, H), dtype=jnp.float32)
    reg_weight = jax.random.normal(k_w, (1, H), dtype=jnp.float32) * 0.05
    reg_bias = jax.random.normal(k_b, (1,), dtype=jnp.float32) * 0.05

    # Case 1: no attention mask (module generates one from the special ids).
    logits = token_regression_forward(
        input_ids, sequence_output, reg_weight, reg_bias, special_ids,
        attention_mask=None)
    logits = jax.block_until_ready(logits)
    ref = _reference(input_ids, sequence_output, reg_weight, reg_bias, special_ids)
    assert logits.shape == (B, S, 1), logits.shape
    assert jnp.allclose(logits, ref, atol=1e-5, rtol=1e-5), (
        float(jnp.max(jnp.abs(logits - ref))))

    # Case 2: explicit attention mask supplied (kept in native int dtype).
    attn = jax.random.bernoulli(k_m, 0.8, (B, S)).astype(jnp.int32)
    logits2 = token_regression_forward(
        input_ids, sequence_output, reg_weight, reg_bias, special_ids,
        attention_mask=attn)
    logits2 = jax.block_until_ready(logits2)
    ref2 = _reference(input_ids, sequence_output, reg_weight, reg_bias,
                      special_ids, attn)
    assert jnp.allclose(logits2, ref2, atol=1e-5, rtol=1e-5), (
        float(jnp.max(jnp.abs(logits2 - ref2))))

    # Case 3: bf16 activations (halved HBM bytes; native bf16 multiply with
    # f32 accumulation in-kernel).  Reference uses the same bf16-quantized
    # activations and weight, so only summation/rounding order differs.
    seq_bf16 = sequence_output.astype(jnp.bfloat16)
    w_bf16 = reg_weight.astype(jnp.bfloat16)
    logits3 = token_regression_forward(
        input_ids, seq_bf16, reg_weight, reg_bias, special_ids,
        attention_mask=attn)
    logits3 = jax.block_until_ready(logits3)
    ref3 = _reference(input_ids, seq_bf16.astype(jnp.float32),
                      w_bf16.astype(jnp.float32), reg_bias, special_ids, attn)
    assert jnp.allclose(logits3, ref3, atol=2e-2, rtol=2e-2), (
        float(jnp.max(jnp.abs(logits3 - ref3))))

    print("KERNEL_OK")
</pallas_src>

<mosaic_0001>
module attributes {stable_mosaic.version = 11 : i64} {
  func.func @_token_regression_kernel(%arg0: i32, %arg1: memref<1x16xi32, #tpu.memory_space<vmem>>, %arg2: memref<16x32xf32, #tpu.memory_space<vmem>>, %arg3: memref<1x32xf32, #tpu.memory_space<vmem>>, %arg4: memref<1x1xf32, #tpu.memory_space<smem>>, %arg5: memref<1x16xf32, #tpu.memory_space<vmem>>) attributes {dimension_semantics = [#tpu.dimension_semantics<parallel>], iteration_bounds = array<i64: 1>, scalar_prefetch = 0 : i64, scratch_operands = 0 : i64, tpu.core_type = #tpu.core_type<tc>, window_params = [{transform_indices = @transform_0, window_bounds = array<i64: 1, 16>}, {transform_indices = @transform_1, window_bounds = array<i64: 16, 32>}, {pipeline_mode = #tpu.pipeline_mode<synchronous>, transform_indices = @transform_2, window_bounds = array<i64: 1, 32>}, {transform_indices = @transform_3, window_bounds = array<i64: 1, 1>}, {transform_indices = @transform_4, window_bounds = array<i64: 1, 16>}]} {
    %c0 = arith.constant 0 : index
    %c0_0 = arith.constant 0 : index
    %0 = vector.load %arg2[%c0, %c0_0] : memref<16x32xf32, #tpu.memory_space<vmem>>, vector<16x32xf32>
    %c0_1 = arith.constant 0 : index
    %c0_2 = arith.constant 0 : index
    %1 = vector.load %arg3[%c0_1, %c0_2] : memref<1x32xf32, #tpu.memory_space<vmem>>, vector<1x32xf32>
    %2 = vector.broadcast %1 : vector<1x32xf32> to vector<16x32xf32>
    %3 = arith.mulf %0, %2 : vector<16x32xf32>
    %cst = arith.constant dense<0.000000e+00> : vector<16xf32>
    %4 = vector.multi_reduction <add>, %3, %cst [1] : vector<16x32xf32> to vector<16xf32>
    %5 = vector.shape_cast %4 : vector<16xf32> to vector<1x16xf32>
    %c0_3 = arith.constant 0 : index
    %c0_4 = arith.constant 0 : index
    %6 = memref.load %arg4[%c0_3, %c0_4] : memref<1x1xf32, #tpu.memory_space<smem>>
    %7 = vector.broadcast %6 : f32 to vector<1x16xf32>
    %8 = arith.addf %5, %7 : vector<1x16xf32>
    %c0_5 = arith.constant 0 : index
    %c0_6 = arith.constant 0 : index
    %9 = vector.load %arg1[%c0_5, %c0_6] : memref<1x16xi32, #tpu.memory_space<vmem>>, vector<1x16xi32>
    %true = arith.constant true
    %10 = vector.broadcast %true : i1 to vector<1x16xi1>
    %c0_i32 = arith.constant 0 : i32
    %11 = vector.broadcast %c0_i32 : i32 to vector<1x16xi32>
    %12 = arith.cmpi ne, %9, %11 : vector<1x16xi32>
    %13 = arith.andi %10, %12 : vector<1x16xi1>
    %c1_i32 = arith.constant 1 : i32
    %14 = vector.broadcast %c1_i32 : i32 to vector<1x16xi32>
    %15 = arith.cmpi ne, %9, %14 : vector<1x16xi32>
    %16 = arith.andi %13, %15 : vector<1x16xi1>
    %c2_i32 = arith.constant 2 : i32
    %17 = vector.broadcast %c2_i32 : i32 to vector<1x16xi32>
    %18 = arith.cmpi ne, %9, %17 : vector<1x16xi32>
    %19 = arith.andi %16, %18 : vector<1x16xi1>
    %20 = arith.extui %19 : vector<1x16xi1> to vector<1x16xi32>
    %21 = arith.sitofp %20 : vector<1x16xi32> to vector<1x16xf32>
    %22 = arith.mulf %8, %21 : vector<1x16xf32>
    %c0_7 = arith.constant 0 : index
    %c0_8 = arith.constant 0 : index
    %23 = vector.load %arg5[%c0_7, %c0_8] : memref<1x16xf32, #tpu.memory_space<vmem>>, vector<1x16xf32>
    tpu.vector_store %arg5[%c0_7, %c0_8], %22 {strides = array<i32>} : memref<1x16xf32, #tpu.memory_space<vmem>>, vector<1x16xf32>,
    return
  }
  func.func @transform_0(%arg0: i32) -> (i32, i32) {
    %c0_i32 = arith.constant 0 : i32
    %c0_i32_0 = arith.constant 0 : i32
    return %c0_i32, %arg0 : i32, i32
  }
  func.func @transform_1(%arg0: i32) -> (i32, i32) {
    %c0_i32 = arith.constant 0 : i32
    %c0_i32_0 = arith.constant 0 : i32
    return %arg0, %c0_i32 : i32, i32
  }
  func.func @transform_2(%arg0: i32) -> (i32, i32) {
    %c0_i32 = arith.constant 0 : i32
    %c0_i32_0 = arith.constant 0 : i32
    %c0_i32_1 = arith.constant 0 : i32
    return %c0_i32, %c0_i32_0 : i32, i32
  }
  func.func @transform_3(%arg0: i32) -> (i32, i32) {
    %c0_i32 = arith.constant 0 : i32
    %c0_i32_0 = arith.constant 0 : i32
    %c0_i32_1 = arith.constant 0 : i32
    return %c0_i32, %c0_i32_0 : i32, i32
  }
  func.func @transform_4(%arg0: i32) -> (i32, i32) {
    %c0_i32 = arith.constant 0 : i32
    %c0_i32_0 = arith.constant 0 : i32
    return %c0_i32, %arg0 : i32, i32
  }
}

</mosaic_0001>

<llo_original>
// kernel: tpu_custom_call.1
$region0: #{tpu_custom_call.1}
  #allocation0 [shape = 'u32[]', space=smem, size = 0x4, offset = 0x4, fixed_abs, tag = 'smem constant byte address 0x4 - core index']
  #allocation1 [shape = 'u32[144,128]{1,0:T(1,128)}', space=vmem, size = 0x12000, scoped, tag = 'internal scratch']
  #allocation2 [shape = 'f32[1,1]{1,0:T(1,128)S(6)}', space=smem, size = 0x200, scoped, tag = 'scoped memory for tpu_custom_call.1']
  %s0 = inlined_call_operand.vmem [shape: s32[1,16], index: 0, kind: input, shape index: {}]
  %s1 = inlined_call_operand.hbm [shape: f32[16,32], index: 1, kind: input, shape index: {}]
  %s2 = inlined_call_operand.vmem [shape: f32[1,32], index: 2, kind: input, shape index: {}]
  %s3 = inlined_call_operand.<no memory space> [shape: f32[1,1], index: 3, kind: input, shape index: {}]
  %s4 = inlined_call_operand.hbm [shape: f32[1,16], index: 4, kind: output, shape index: {}]
  %s5 = sld [smem:[#allocation0]]
  $region30: #{tpu_custom_call.1} parent=0
    _
  %s7 = ssub.s32 1, %s5
  %s8 = scalar_select 0, %s7, %s5
  %9 = sst [smem:[#allocation2]] %s3
  $region1: #{tpu_custom_call.1} parent=0
    #allocation3 [shape = 'u8[8192]{0}', space=vmem, size = 0x2000, scoped, tag = 'input window, operand 1, single buffered']
    #allocation4 [shape = 's32[1]{0}', space=sflag, size = 0x4, scoped, tag = 'scoped memory for tpu_custom_call.1']
    #allocation5 [shape = 's32[1]{0}', space=sflag, size = 0x4, scoped, tag = 'scoped memory for tpu_custom_call.1']
    #allocation6 [shape = 'u8[512]{0}', space=vmem, size = 0x400, scoped, tag = 'output window, operand 0, single buffered']
    %10 = vsyncpa [#allocation4], 0
    %11 = vsyncpa [#allocation5], 0
    // Predicated region
    $region2: #{tpu_custom_call.1} parent=1 // pred_check
      _
    $region3: #{tpu_custom_call.1} parent=1 // pred_check_branch
      %13 = sbr.rel (0) target = $region5
    $region4: #{tpu_custom_call.1} parent=1 // pred_region
      _
    $region5: #{tpu_custom_call.1} parent=1 // pred_fallthru
      _
    // Predicated region
    $region6: #{tpu_custom_call.1} parent=1 // pred_check
      _
    $region7: #{tpu_custom_call.1} parent=1 // pred_check_branch
      %15 = sbr.rel (0) target = $region9
    $region8: #{tpu_custom_call.1} parent=1 // pred_region
      %s17 = ssub.s32 256, 256
      %18 = vsyncadd [#allocation4], %s17
      %s19 = sshll.u32 [#allocation3], 4
      %s20 = int_to_ptr.vmem [resolvable:$true] %s19
      %25 = dma.hbm_to_vmem [thread:$0]  %s1, 256, %s20, [#allocation4], 128, 128, 8
    $region9: #{tpu_custom_call.1} parent=1 // pred_fallthru
      _
    // Predicated region
    $region10: #{tpu_custom_call.1} parent=1 // pred_check
      _
    $region11: #{tpu_custom_call.1} parent=1 // pred_check_branch
      %27 = sbr.rel (0) target = $region13
    $region12: #{tpu_custom_call.1} parent=1 // pred_region
      _
    $region13: #{tpu_custom_call.1} parent=1 // pred_fallthru
      _
    // Predicated region
    $region14: #{tpu_custom_call.1} parent=1 // pred_check
      _
    $region15: #{tpu_custom_call.1} parent=1 // pred_check_branch
      %29 = sbr.rel (0) target = $region17
    $region16: #{tpu_custom_call.1} parent=1 // pred_region
      _
    $region17: #{tpu_custom_call.1} parent=1 // pred_fallthru
      _
    // Predicated region
    $region18: #{tpu_custom_call.1} parent=1 // pred_check
      _
    $region19: #{tpu_custom_call.1} parent=1 // pred_check_branch
      %31 = sbr.rel (0) target = $region21
    $region20: #{tpu_custom_call.1} parent=1 // pred_region
      %32 = dma.done [#allocation4], 256
    $region21: #{tpu_custom_call.1} parent=1 // pred_fallthru
      _
    %v33 = vld [vmem:[#allocation3] sm:$0xff]
    %v34 = vld [vmem:[#allocation3 + $0x8] sm:$0xff]
    %v35 = vld [vmem:[%s2] sm:$0x1]
    %v37 = vlaneseq
    %v38 = vshrl.u32 %v37, 7
    %v39 = vsub.s32 0, %v38
    %v40 = vrot.slane %v35, %v39
    %v42 = vmul.f32 %v33, %v40
    %v43 = vmul.f32 %v34, %v40
    %vm44 = vcmask 261120
    %v45 = vsel %vm44, %v42, 0.0
    %46 = vadd.xlane.f32.xlu0 %v45
    %v47 = vpop.xlane.xlu0 %46
    %v48 = vsel %vm44, %v43, 0.0
    %49 = vadd.xlane.f32.xlu0 %v48
    %v50 = vpop.xlane.xlu0 %49
    %s51 = sld [smem:[#allocation2]]
    %v52 = vstv %s51
    %v53 = vadd.f32 %v47, %v52
    %v54 = vadd.f32 %v50, %v52
    %v55 = vld [vmem:[%s0] sm:$0x1]
    %vm56 = vcmp.ne.s32.totalorder %v55, 0
    %vm57 = vcmp.ne.s32.totalorder %v55, 1
    %vm58 = vmand %vm56, %vm57
    %vm59 = vcmp.ne.s32.totalorder %v55, 2
    %vm60 = vmand %vm58, %vm59
    %v61 = vsel %vm60, 1, 0
    %v62 = vcvt.s32.f32 %v61
    %v64 = vlaneseq
    %v65 = vshrl.u32 %v64, 7
    %v66 = vsub.s32 0, %v65
    %v67 = vrot.slane %v62, %v66
    %69 = vbcast.lane.b32.xlu0 %v67, 256
    %v70 = vpop.permute.xlu0 %69
    %s72 = sor.u32 256, 8
    %73 = vbcast.lane.b32.xlu0 %v67, %s72
    %v74 = vpop.permute.xlu0 %73
    %v77 = vmul.f32 %v53, %v70
    %v78 = vmul.f32 %v54, %v74
    %81 = vset.pattern.permute.xlu0 0
    %82 = vperm.xlu0 %81, %v77
    %v83 = vpop.permute.xlu0 %82
    %84 = vset.pattern.permute.xlu0 0
    %85 = vperm.xlu0 %84, %v78
    %v86 = vpop.permute.xlu0 %85
    %v87 = vlaneseq
    %v88 = vand.u32 %v87, 127
    %v89 = vlaneseq
    %v90 = vshrl.u32 %v89, 7
    %v91 = vsub.s32 %v88, %v90
    %v92 = vrot.slane %v83, %v91
    %v93 = vadd.s32 %v88, 4294967288
    %v94 = vlaneseq
    %v95 = vshrl.u32 %v94, 7
    %v96 = vsub.s32 %v93, %v95
    %v97 = vrot.slane %v86, %v96
    %vm98 = vcmask 130112
    %v99 = vsel %vm98, %v97, %v92
    %vm101 = vcmask 122880
    %102 = vst.msk [vmem:[#allocation6] sm:$0x1] %vm101, %v99
    // Predicated region
    $region22: #{tpu_custom_call.1} parent=1 // pred_check
      _
    $region23: #{tpu_custom_call.1} parent=1 // pred_check_branch
      %104 = sbr.rel (0) target = $region25
    $region24: #{tpu_custom_call.1} parent=1 // pred_region
      %s106 = ssub.s32 16, 16
      %107 = vsyncadd [#allocation5], %s106
      %s109 = sshll.u32 [#allocation6], 4
      %s110 = int_to_ptr.vmem [resolvable:$true] %s109
      %112 = dma.vmem_to_hbm [thread:$0]  %s110, 16, %s4, [#allocation5]
    $region25: #{tpu_custom_call.1} parent=1 // pred_fallthru
      _
    // Predicated region
    $region26: #{tpu_custom_call.1} parent=1 // pred_check
      _
    $region27: #{tpu_custom_call.1} parent=1 // pred_check_branch
      %114 = sbr.rel (0) target = $region29
    $region28: #{tpu_custom_call.1} parent=1 // pred_region
      %115 = dma.done [#allocation5], 16
    $region29: #{tpu_custom_call.1} parent=1 // pred_fallthru
      _
    %116 = vsyncpa [#allocation4], 1
    %117 = vsyncpa [#allocation5], 1

</llo_original>
